<compile_context>
chip_gen: v5e
topology: v5e:2x2
jax: 0.10.0
libtpu: 0.0.40
codegen_flags: <defaults>
</compile_context>

<pallas_src>
import jax
import jax.numpy as jnp
from jax.experimental import pallas as pl
from jax.experimental.pallas import tpu as pltpu


def _round_up(x: int, m: int) -> int:
    return ((x + m - 1) // m) * m


def _choose_batch_tile(B: int) -> int:
    """Pick the batch tile.

    Small batches run as a single full block (block dim == array dim).
    Large batches use up to 1024-row tiles, but never fewer than 2 grid steps
    so dimension_semantics=("parallel",) can use both TensorCores on v7x.
    """
    if B <= 8:
        return B
    return min(1024, _round_up((B + 1) // 2, 8))


def _policy_kernel(x_ref, we_ref, be_ref, wh_ref, bh_ref, out_ref):
    """Fused forward for one batch tile.

    x_ref  : (TM, K)    f32 observation rows (ragged last tile allowed)
    we_ref : (K, H)     bf16 encoder weight (pre-transposed)
    be_ref : (1, H)     f32 encoder bias
    wh_ref : (H, HEAD)  bf16 fused [decoder | value] weight, HEAD = n_act + 1
    bh_ref : (1, HEAD)  f32 fused [decoder | value] bias
    out_ref: (TM, HEAD) f32 fused head output (actions | value)
    """
    # Encoder matmul: bf16 operands, f32 accumulation on the MXU.
    x = x_ref[...].astype(jnp.bfloat16)
    h = jnp.dot(x, we_ref[...], preferred_element_type=jnp.float32)
    # Bias + ReLU epilogue in f32 (v5e VPU has no bf16 path).
    h = jnp.maximum(h + be_ref[...], 0.0)
    # Fused [decoder | value] head.
    out_ref[...] = (
        jnp.dot(h.astype(jnp.bfloat16), wh_ref[...],
                preferred_element_type=jnp.float32)
        + bh_ref[...]
    )


def prepare_params(w_enc, b_enc, w_dec, b_dec, w_val, b_val):
    """One-time parameter prep (hoisted out of the per-step forward):
    fuse the action decoder + value head into one weight/bias and cast the
    matmul operands to bf16."""
    w_head = jnp.concatenate([w_dec, w_val], axis=1)
    b_head = jnp.concatenate([b_dec, b_val], axis=1)
    return (w_enc.astype(jnp.bfloat16),
            b_enc.astype(jnp.float32),
            w_head.astype(jnp.bfloat16),
            b_head.astype(jnp.float32))


@jax.jit
def default_policy_forward(obs, w_enc, b_enc, w_head, b_head):
    """obs: (B, obs_size) float32; params from prepare_params().

    Returns (actions (B, n_act), value (B, 1)) — same math as the PyTorch
    `Default` policy (y = x @ W + b per nn.Linear, weights stored transposed).
    """
    B, K = obs.shape
    H = w_enc.shape[1]
    HEAD = w_head.shape[1]          # n_act + 1
    n_act = HEAD - 1

    TM = _choose_batch_tile(B)
    grid = (pl.cdiv(B, TM),)

    cost = pl.CostEstimate(
        flops=2 * B * H * (K + HEAD),
        transcendentals=0,
        bytes_accessed=(obs.size * 4            # f32 obs read
                        + w_enc.size * 2        # bf16 weights
                        + w_head.size * 2
                        + b_enc.size * 4 + b_head.size * 4
                        + B * HEAD * 4),        # f32 fused-head writeback
    )

    out = pl.pallas_call(
        _policy_kernel,
        out_shape=jax.ShapeDtypeStruct((B, HEAD), jnp.float32),
        grid=grid,
        in_specs=[
            pl.BlockSpec((TM, K), lambda i: (i, 0)),     # obs rows (tiled, no pad)
            pl.BlockSpec((K, H), lambda i: (0, 0)),      # encoder weight (bf16)
            pl.BlockSpec((1, H), lambda i: (0, 0)),      # encoder bias (f32)
            pl.BlockSpec((H, HEAD), lambda i: (0, 0)),   # fused head weight (bf16)
            pl.BlockSpec((1, HEAD), lambda i: (0, 0)),   # fused head bias (f32)
        ],
        out_specs=pl.BlockSpec((TM, HEAD), lambda i: (i, 0)),
        compiler_params=pltpu.CompilerParams(
            dimension_semantics=("parallel",),
        ),
        cost_estimate=cost,
    )(obs, w_enc, b_enc, w_head, b_head)

    actions = out[:, :n_act]
    value = out[:, n_act:]
    return actions, value


# ------------------------------ references ---------------------------------

def _linear_params(key, in_features, out_features):
    """Deterministic init matching nn.Linear's U(-1/sqrt(in), 1/sqrt(in))."""
    k_w, k_b = jax.random.split(key)
    bound = 1.0 / jnp.sqrt(jnp.float32(in_features))
    w = jax.random.uniform(k_w, (in_features, out_features), jnp.float32,
                           minval=-bound, maxval=bound)
    b = jax.random.uniform(k_b, (1, out_features), jnp.float32,
                           minval=-bound, maxval=bound)
    return w, b


def _reference_f32(obs_flat, w_enc, b_enc, w_dec, b_dec, w_val, b_val):
    """PyTorch-equivalent f32 reference."""
    h = jnp.maximum(obs_flat @ w_enc + b_enc, 0.0)
    return h @ w_dec + b_dec, h @ w_val + b_val


def _reference_bf16(obs_flat, w_enc_bf, b_enc, w_head_bf, b_head, n_act):
    """Reference that mirrors the kernel's bf16-operand / f32-accumulate math."""
    x = obs_flat.astype(jnp.bfloat16).astype(jnp.float32)
    h = jnp.maximum(x @ w_enc_bf.astype(jnp.float32) + b_enc, 0.0)
    hb = h.astype(jnp.bfloat16).astype(jnp.float32)
    out = hb @ w_head_bf.astype(jnp.float32) + b_head
    return out[:, :n_act], out[:, n_act:]


# --------------------------------- main -------------------------------------

if __name__ == "__main__":
    # Synthetic env: observation_space.shape = (4, 4, 8) -> obs_size = 128,
    # Discrete action space with n = 6, hidden_size = 128 (module default).
    obs_shape = (4, 4, 8)
    obs_size = 128
    hidden_size = 128
    n_actions = 6

    key = jax.random.PRNGKey(0)
    k_obs, k_enc, k_dec, k_val = jax.random.split(key, 4)

    w_enc, b_enc = _linear_params(k_enc, obs_size, hidden_size)
    w_dec, b_dec = _linear_params(k_dec, hidden_size, n_actions)
    w_val, b_val = _linear_params(k_val, hidden_size, 1)

    # Hoisted, done once when parameters change (not per forward call).
    params = prepare_params(w_enc, b_enc, w_dec, b_dec, w_val, b_val)
    params = jax.block_until_ready(params)

    def check(B, seed):
        obs = jax.random.normal(jax.random.PRNGKey(seed), (B,) + obs_shape,
                                jnp.float32)
        obs_flat = obs.reshape(B, -1)
        actions, value = default_policy_forward(obs_flat, *params)
        jax.block_until_ready((actions, value))
        assert actions.shape == (B, n_actions) and value.shape == (B, 1)
        # Tight check vs a reference using identical bf16-operand numerics.
        a_bf, v_bf = _reference_bf16(obs_flat, *params, n_actions)
        assert jnp.allclose(actions, a_bf, atol=2e-3, rtol=2e-3)
        assert jnp.allclose(value, v_bf, atol=2e-3, rtol=2e-3)
        # Loose check vs the original f32 (PyTorch-equivalent) reference.
        a_f32, v_f32 = _reference_f32(obs_flat, w_enc, b_enc,
                                      w_dec, b_dec, w_val, b_val)
        assert jnp.allclose(actions, a_f32, atol=5e-2, rtol=5e-2)
        assert jnp.allclose(value, v_f32, atol=5e-2, rtol=5e-2)

    check(8, 0)      # small batch: single full block, grid=(1,)
    check(256, 1)    # grid=(2,), 128-row tiles -> both TCs on v7x
    check(100, 2)    # ragged last tile (TM=56, grid=(2,), partial block)
    check(2048, 3)   # large-batch path (TM=1024, grid=(2,))

    # TODO(synk): MultiDiscrete action spaces (ModuleList of decoders) fuse the
    # same way by concatenating every per-dimension head into W_head/b_head.
    print("KERNEL_OK")
</pallas_src>

<mosaic_0001>
module attributes {stable_mosaic.version = 11 : i64} {
  func.func @_policy_kernel(%arg0: i32, %arg1: memref<8x128xf32, #tpu.memory_space<vmem>>, %arg2: memref<128x128xbf16, #tpu.memory_space<vmem>>, %arg3: memref<1x128xf32, #tpu.memory_space<vmem>>, %arg4: memref<128x7xbf16, #tpu.memory_space<vmem>>, %arg5: memref<1x7xf32, #tpu.memory_space<vmem>>, %arg6: memref<8x7xf32, #tpu.memory_space<vmem>>) attributes {dimension_semantics = [#tpu.dimension_semantics<parallel>], iteration_bounds = array<i64: 1>, scalar_prefetch = 0 : i64, scratch_operands = 0 : i64, tpu.core_type = #tpu.core_type<tc>, window_params = [{transform_indices = @transform_0, window_bounds = array<i64: 8, 128>}, {pipeline_mode = #tpu.pipeline_mode<synchronous>, transform_indices = @transform_1, window_bounds = array<i64: 128, 128>}, {pipeline_mode = #tpu.pipeline_mode<synchronous>, transform_indices = @transform_2, window_bounds = array<i64: 1, 128>}, {pipeline_mode = #tpu.pipeline_mode<synchronous>, transform_indices = @transform_3, window_bounds = array<i64: 128, 7>}, {pipeline_mode = #tpu.pipeline_mode<synchronous>, transform_indices = @transform_4, window_bounds = array<i64: 1, 7>}, {transform_indices = @transform_5, window_bounds = array<i64: 8, 7>}]} {
    %c0 = arith.constant 0 : index
    %c0_0 = arith.constant 0 : index
    %0 = vector.load %arg1[%c0, %c0_0] : memref<8x128xf32, #tpu.memory_space<vmem>>, vector<8x128xf32>
    %1 = arith.truncf %0 : vector<8x128xf32> to vector<8x128xbf16>
    %c0_1 = arith.constant 0 : index
    %c0_2 = arith.constant 0 : index
    %2 = vector.load %arg2[%c0_1, %c0_2] : memref<128x128xbf16, #tpu.memory_space<vmem>>, vector<128x128xbf16>
    %cst = arith.constant dense<0.000000e+00> : vector<8x128xf32>
    %3 = tpu.matmul %1, %2, %cst {dimension_numbers = #tpu.dot_dimension_numbers<[1], [0], [0], [1], [0, 0, 1, 1], [], []>} : vector<8x128xbf16>, vector<128x128xbf16>, vector<8x128xf32> -> vector<8x128xf32>
    %c0_3 = arith.constant 0 : index
    %c0_4 = arith.constant 0 : index
    %4 = vector.load %arg3[%c0_3, %c0_4] : memref<1x128xf32, #tpu.memory_space<vmem>>, vector<1x128xf32>
    %5 = vector.broadcast %4 : vector<1x128xf32> to vector<8x128xf32>
    %6 = arith.addf %3, %5 : vector<8x128xf32>
    %cst_5 = arith.constant 0.000000e+00 : f32
    %7 = vector.broadcast %cst_5 : f32 to vector<8x128xf32>
    %8 = arith.maximumf %6, %7 : vector<8x128xf32>
    %9 = arith.truncf %8 : vector<8x128xf32> to vector<8x128xbf16>
    %c0_6 = arith.constant 0 : index
    %c0_7 = arith.constant 0 : index
    %10 = vector.load %arg4[%c0_6, %c0_7] : memref<128x7xbf16, #tpu.memory_space<vmem>>, vector<128x7xbf16>
    %cst_8 = arith.constant dense<0.000000e+00> : vector<8x7xf32>
    %11 = tpu.matmul %9, %10, %cst_8 {dimension_numbers = #tpu.dot_dimension_numbers<[1], [0], [0], [1], [0, 0, 1, 1], [], []>} : vector<8x128xbf16>, vector<128x7xbf16>, vector<8x7xf32> -> vector<8x7xf32>
    %c0_9 = arith.constant 0 : index
    %c0_10 = arith.constant 0 : index
    %12 = vector.load %arg5[%c0_9, %c0_10] : memref<1x7xf32, #tpu.memory_space<vmem>>, vector<1x7xf32>
    %13 = vector.broadcast %12 : vector<1x7xf32> to vector<8x7xf32>
    %14 = arith.addf %11, %13 : vector<8x7xf32>
    %c0_11 = arith.constant 0 : index
    %c0_12 = arith.constant 0 : index
    %15 = vector.load %arg6[%c0_11, %c0_12] : memref<8x7xf32, #tpu.memory_space<vmem>>, vector<8x7xf32>
    tpu.vector_store %arg6[%c0_11, %c0_12], %14 {strides = array<i32>} : memref<8x7xf32, #tpu.memory_space<vmem>>, vector<8x7xf32>,
    return
  }
  func.func @transform_0(%arg0: i32) -> (i32, i32) {
    %c0_i32 = arith.constant 0 : i32
    %c0_i32_0 = arith.constant 0 : i32
    return %arg0, %c0_i32 : i32, i32
  }
  func.func @transform_1(%arg0: i32) -> (i32, i32) {
    %c0_i32 = arith.constant 0 : i32
    %c0_i32_0 = arith.constant 0 : i32
    %c0_i32_1 = arith.constant 0 : i32
    return %c0_i32, %c0_i32_0 : i32, i32
  }
  func.func @transform_2(%arg0: i32) -> (i32, i32) {
    %c0_i32 = arith.constant 0 : i32
    %c0_i32_0 = arith.constant 0 : i32
    %c0_i32_1 = arith.constant 0 : i32
    return %c0_i32, %c0_i32_0 : i32, i32
  }
  func.func @transform_3(%arg0: i32) -> (i32, i32) {
    %c0_i32 = arith.constant 0 : i32
    %c0_i32_0 = arith.constant 0 : i32
    %c0_i32_1 = arith.constant 0 : i32
    return %c0_i32, %c0_i32_0 : i32, i32
  }
  func.func @transform_4(%arg0: i32) -> (i32, i32) {
    %c0_i32 = arith.constant 0 : i32
    %c0_i32_0 = arith.constant 0 : i32
    %c0_i32_1 = arith.constant 0 : i32
    return %c0_i32, %c0_i32_0 : i32, i32
  }
  func.func @transform_5(%arg0: i32) -> (i32, i32) {
    %c0_i32 = arith.constant 0 : i32
    %c0_i32_0 = arith.constant 0 : i32
    return %arg0, %c0_i32 : i32, i32
  }
}

</mosaic_0001>

<llo_original>
// kernel: default_policy_forward.1
$region0: #{default_policy_forward.1}
  #allocation0 [shape = 'u32[]', space=smem, size = 0x4, offset = 0x4, fixed_abs, tag = 'smem constant byte address 0x4 - core index']
  #allocation1 [shape = 'u32[72,128]{1,0:T(1,128)}', space=vmem, size = 0x9000, scoped, tag = 'internal scratch']
  %s0 = inlined_call_operand.hbm [shape: f32[8,128], index: 0, kind: input, shape index: {}]
  %s1 = inlined_call_operand.vmem [shape: bf16[128,128], index: 1, kind: input, shape index: {}]
  %s2 = inlined_call_operand.vmem [shape: f32[1,128], index: 2, kind: input, shape index: {}]
  %s3 = inlined_call_operand.vmem [shape: bf16[128,7], index: 3, kind: input, shape index: {}]
  %s4 = inlined_call_operand.vmem [shape: f32[1,7], index: 4, kind: input, shape index: {}]
  %s5 = inlined_call_operand.vmem [shape: f32[8,7], index: 5, kind: output, shape index: {}]
  %s6 = sld [smem:[#allocation0]]
  $region34: #{default_policy_forward.1} parent=0
    _
  %s8 = ssub.s32 1, %s6
  %s9 = scalar_select 0, %s8, %s6
  $region1: #{default_policy_forward.1} parent=0
    #allocation2 [shape = 'u8[4096]{0}', space=vmem, size = 0x1000, scoped, tag = 'input window, operand 0, single buffered']
    #allocation3 [shape = 's32[1]{0}', space=sflag, size = 0x4, scoped, tag = 'scoped memory for default_policy_forward.1']
    %10 = vsyncpa [#allocation3], 0
    // Predicated region
    $region2: #{default_policy_forward.1} parent=1 // pred_check
      _
    $region3: #{default_policy_forward.1} parent=1 // pred_check_branch
      %12 = sbr.rel (0) target = $region5
    $region4: #{default_policy_forward.1} parent=1 // pred_region
      %14 = vsyncadd [#allocation3], 0
      %s16 = sshll.u32 %s0, 4
      %s17 = int_to_ptr.hbm [resolvable:$true] %s16
      %s18 = sshll.u32 [#allocation2], 4
      %s19 = int_to_ptr.vmem [resolvable:$true] %s18
      %21 = dma.hbm_to_vmem [thread:$0]  %s17, 128, %s19, [#allocation3]
    $region5: #{default_policy_forward.1} parent=1 // pred_fallthru
      _
    // Predicated region
    $region6: #{default_policy_forward.1} parent=1 // pred_check
      _
    $region7: #{default_policy_forward.1} parent=1 // pred_check_branch
      %23 = sbr.rel (0) target = $region9
    $region8: #{default_policy_forward.1} parent=1 // pred_region
      _
    $region9: #{default_policy_forward.1} parent=1 // pred_fallthru
      _
    // Predicated region
    $region10: #{default_policy_forward.1} parent=1 // pred_check
      _
    $region11: #{default_policy_forward.1} parent=1 // pred_check_branch
      %25 = sbr.rel (0) target = $region13
    $region12: #{default_policy_forward.1} parent=1 // pred_region
      _
    $region13: #{default_policy_forward.1} parent=1 // pred_fallthru
      _
    // Predicated region
    $region14: #{default_policy_forward.1} parent=1 // pred_check
      _
    $region15: #{default_policy_forward.1} parent=1 // pred_check_branch
      %27 = sbr.rel (0) target = $region17
    $region16: #{default_policy_forward.1} parent=1 // pred_region
      _
    $region17: #{default_policy_forward.1} parent=1 // pred_fallthru
      _
    // Predicated region
    $region18: #{default_policy_forward.1} parent=1 // pred_check
      _
    $region19: #{default_policy_forward.1} parent=1 // pred_check_branch
      %29 = sbr.rel (0) target = $region21
    $region20: #{default_policy_forward.1} parent=1 // pred_region
      _
    $region21: #{default_policy_forward.1} parent=1 // pred_fallthru
      _
    // Predicated region
    $region22: #{default_policy_forward.1} parent=1 // pred_check
      _
    $region23: #{default_policy_forward.1} parent=1 // pred_check_branch
      %31 = sbr.rel (0) target = $region25
    $region24: #{default_policy_forward.1} parent=1 // pred_region
      %33 = dma.done [#allocation3], 128
    $region25: #{default_policy_forward.1} parent=1 // pred_fallthru
      _
    %v34 = vld [vmem:[#allocation2] sm:$0xff]
    %v35 = vpack.c.bf16 %v34, %v34
    %v36 = vld [vmem:[%s1] sm:$0xf]
    %v37 = vld [vmem:[%s1 + $0x4] sm:$0xf]
    %v38 = vld [vmem:[%s1 + $0x8] sm:$0xf]
    %v39 = vld [vmem:[%s1 + $0xc] sm:$0xf]
    %v40 = vld [vmem:[%s1 + $0x10] sm:$0xf]
    %v41 = vld [vmem:[%s1 + $0x14] sm:$0xf]
    %v42 = vld [vmem:[%s1 + $0x18] sm:$0xf]
    %v43 = vld [vmem:[%s1 + $0x1c] sm:$0xf]
    %v44 = vld [vmem:[%s1 + $0x20] sm:$0xf]
    %v45 = vld [vmem:[%s1 + $0x24] sm:$0xf]
    %v46 = vld [vmem:[%s1 + $0x28] sm:$0xf]
    %v47 = vld [vmem:[%s1 + $0x2c] sm:$0xf]
    %v48 = vld [vmem:[%s1 + $0x30] sm:$0xf]
    %v49 = vld [vmem:[%s1 + $0x34] sm:$0xf]
    %v50 = vld [vmem:[%s1 + $0x38] sm:$0xf]
    %v51 = vld [vmem:[%s1 + $0x3c] sm:$0xf]
    %v52 = vld [vmem:[%s2] sm:$0x1]
    %v54 = vperm.slane %v52, 0
    %v72 = vunpack.c.l.b16 %v36
    %v73 = vunpack.c.l.b16 %v37
    %v74 = vunpack.c.l.b16 %v38
    %v75 = vunpack.c.l.b16 %v39
    %v76 = vunpack.c.l.b16 %v40
    %v77 = vunpack.c.l.b16 %v41
    %v78 = vunpack.c.l.b16 %v42
    %v79 = vunpack.c.l.b16 %v43
    %v80 = vunpack.c.l.b16 %v44
    %v81 = vunpack.c.l.b16 %v45
    %v82 = vunpack.c.l.b16 %v46
    %v83 = vunpack.c.l.b16 %v47
    %v84 = vunpack.c.l.b16 %v48
    %v85 = vunpack.c.l.b16 %v49
    %v86 = vunpack.c.l.b16 %v50
    %v87 = vunpack.c.l.b16 %v51
    %v88 = vpack.c.b16 %v73, %v72
    %v89 = vpack.c.b16 %v75, %v74
    %v90 = vpack.c.b16 %v77, %v76
    %v91 = vpack.c.b16 %v79, %v78
    %v92 = vpack.c.b16 %v81, %v80
    %v93 = vpack.c.b16 %v83, %v82
    %v94 = vpack.c.b16 %v85, %v84
    %v95 = vpack.c.b16 %v87, %v86
    %104 = vmatpush.bf16.msra.mxu0 %v95
    %105 = vmatpush.bf16.msra.mxu0 %v94
    %106 = vmatpush.bf16.msra.mxu0 %v93
    %107 = vmatpush.bf16.msra.mxu0 %v92
    %108 = vmatpush.bf16.msra.mxu0 %v91
    %109 = vmatpush.bf16.msra.mxu0 %v90
    %110 = vmatpush.bf16.msra.mxu0 %v89
    %111 = vmatpush.bf16.msra.mxu0 %v88
    %112 = vmatmul.bf16.gmra.mxu0 %v35
    %v113 = vpop.f32.mrf.mxu0
    %v114 = vadd.f32 %v54, %v113
    %v115 = vpop.f32.mrf.mxu0
    %116 = vdwg.mxu0
    %v117 = vmax.f32 %v114, 0.0
    %v118 = vpack.c.bf16 %v117, %v117
    %v119 = vld [vmem:[%s3] sm:$0xf]
    %v120 = vld [vmem:[%s3 + $0x4] sm:$0xf]
    %v121 = vld [vmem:[%s3 + $0x8] sm:$0xf]
    %v122 = vld [vmem:[%s3 + $0xc] sm:$0xf]
    %v123 = vld [vmem:[%s3 + $0x10] sm:$0xf]
    %v124 = vld [vmem:[%s3 + $0x14] sm:$0xf]
    %v125 = vld [vmem:[%s3 + $0x18] sm:$0xf]
    %v126 = vld [vmem:[%s3 + $0x1c] sm:$0xf]
    %v127 = vld [vmem:[%s3 + $0x20] sm:$0xf]
    %v128 = vld [vmem:[%s3 + $0x24] sm:$0xf]
    %v129 = vld [vmem:[%s3 + $0x28] sm:$0xf]
    %v130 = vld [vmem:[%s3 + $0x2c] sm:$0xf]
    %v131 = vld [vmem:[%s3 + $0x30] sm:$0xf]
    %v132 = vld [vmem:[%s3 + $0x34] sm:$0xf]
    %v133 = vld [vmem:[%s3 + $0x38] sm:$0xf]
    %v134 = vld [vmem:[%s3 + $0x3c] sm:$0xf]
    %v135 = vld [vmem:[%s4] sm:$0x1]
    %v137 = vperm.slane %v135, 0
    %v155 = vunpack.c.l.b16 %v119
    %v156 = vunpack.c.l.b16 %v120
    %v157 = vunpack.c.l.b16 %v121
    %v158 = vunpack.c.l.b16 %v122
    %v159 = vunpack.c.l.b16 %v123
    %v160 = vunpack.c.l.b16 %v124
    %v161 = vunpack.c.l.b16 %v125
    %v162 = vunpack.c.l.b16 %v126
    %v163 = vunpack.c.l.b16 %v127
    %v164 = vunpack.c.l.b16 %v128
    %v165 = vunpack.c.l.b16 %v129
    %v166 = vunpack.c.l.b16 %v130
    %v167 = vunpack.c.l.b16 %v131
    %v168 = vunpack.c.l.b16 %v132
    %v169 = vunpack.c.l.b16 %v133
    %v170 = vunpack.c.l.b16 %v134
    %v171 = vpack.c.b16 %v156, %v155
    %v172 = vpack.c.b16 %v158, %v157
    %v173 = vpack.c.b16 %v160, %v159
    %v174 = vpack.c.b16 %v162, %v161
    %v175 = vpack.c.b16 %v164, %v163
    %v176 = vpack.c.b16 %v166, %v165
    %v177 = vpack.c.b16 %v168, %v167
    %v178 = vpack.c.b16 %v170, %v169
    %187 = vmatpush.bf16.msra.mxu0 %v178
    %188 = vmatpush.bf16.msra.mxu0 %v177
    %189 = vmatpush.bf16.msra.mxu0 %v176
    %190 = vmatpush.bf16.msra.mxu0 %v175
    %191 = vmatpush.bf16.msra.mxu0 %v174
    %192 = vmatpush.bf16.msra.mxu0 %v173
    %193 = vmatpush.bf16.msra.mxu0 %v172
    %194 = vmatpush.bf16.msra.mxu0 %v171
    %195 = vmatmul.bf16.gmra.mxu0 %v118
    %v196 = vpop.f32.mrf.mxu0
    %v197 = vadd.f32 %v137, %v196
    %v198 = vpop.f32.mrf.mxu0
    %199 = vdwg.mxu0
    %vm200 = vcmask 56320
    %201 = vst.msk [vmem:[%s5] sm:$0xff] %vm200, %v197
    // Predicated region
    $region26: #{default_policy_forward.1} parent=1 // pred_check
      _
    $region27: #{default_policy_forward.1} parent=1 // pred_check_branch
      %203 = sbr.rel (0) target = $region29
    $region28: #{default_policy_forward.1} parent=1 // pred_region
      _
    $region29: #{default_policy_forward.1} parent=1 // pred_fallthru
      _
    // Predicated region
    $region30: #{default_policy_forward.1} parent=1 // pred_check
      _
    $region31: #{default_policy_forward.1} parent=1 // pred_check_branch
      %205 = sbr.rel (0) target = $region33
    $region32: #{default_policy_forward.1} parent=1 // pred_region
      _
    $region33: #{default_policy_forward.1} parent=1 // pred_fallthru
      _
    %206 = vsyncpa [#allocation3], 1

</llo_original>
